<compile_context>
chip_gen: v5e
topology: v5e:2x2
jax: 0.10.0
libtpu: 0.0.40
codegen_flags: <defaults>
</compile_context>

<pallas_src>
import functools

import jax
import jax.numpy as jnp
from jax import lax
from jax.experimental import pallas as pl
from jax.experimental.pallas import tpu as pltpu

INPUT_SIZE = 13
HIDDEN_SIZES = [256, 128, 64]
OUTPUT_SIZE = 8
BN_EPS = 1e-5

# flops per batch row: 2 * sum(in*out) over the 4 linears
_FLOPS_PER_ROW = 2 * (
    INPUT_SIZE * HIDDEN_SIZES[0]
    + HIDDEN_SIZES[0] * HIDDEN_SIZES[1]
    + HIDDEN_SIZES[1] * HIDDEN_SIZES[2]
    + HIDDEN_SIZES[2] * OUTPUT_SIZE
)


def _round_up(x, m):
    return ((x + m - 1) // m) * m


# --------------------------------------------------------------------------
# Kernel: one batch tile of the BN-folded MLP.
# --------------------------------------------------------------------------
def _mlp_kernel(
    x_ref,
    w1_ref, b1_ref,
    w2_ref, b2_ref,
    w3_ref, b3_ref,
    w4_ref, b4_ref,
    o_ref,
    *,
    precision,
):
    def linear(h, w_ref, b_ref):
        # Cast activations to the weight dtype (bf16 default, f32 optional) for
        # the MXU; always accumulate in f32; bias add / ReLU stay f32.
        return jnp.dot(
            h.astype(w_ref.dtype), w_ref[...],
            preferred_element_type=jnp.float32,
            precision=precision,
        ) + b_ref[...]

    h = x_ref[...]
    h = jnp.maximum(linear(h, w1_ref, b1_ref), 0.0)
    h = jnp.maximum(linear(h, w2_ref, b2_ref), 0.0)
    h = jnp.maximum(linear(h, w3_ref, b3_ref), 0.0)
    o_ref[...] = linear(h, w4_ref, b4_ref).astype(o_ref.dtype)


# --------------------------------------------------------------------------
# Parameter prep: fold eval-mode BatchNorm into the following Linear layer.
# --------------------------------------------------------------------------
def fold_params(raw_params, matmul_dtype=jnp.bfloat16):
    """raw_params = [w,b,gamma,beta,run_mean,run_var] x 3 hidden layers + [w4,b4].

    BN_i(ReLU(x @ W_i + b_i)) followed by Linear_{i+1} is rewritten so that
    the BN affine (scale, shift) is absorbed into W_{i+1}, b_{i+1}.
    Returns [w1,b1,w2,b2,w3,b3,w4,b4] with weights cast to `matmul_dtype`
    (bf16 by default: MXU-native on v5e/v6e/v7x) and biases kept in float32.
    """
    folded = []
    scale = None   # [F_in]   pending BN scale for the next Linear's input
    shift = None   # [1,F_in] pending BN shift
    for li in range(len(HIDDEN_SIZES)):
        w, b, g, be, rm, rv = raw_params[6 * li: 6 * li + 6]
        if scale is not None:
            b = shift @ w + b
            w = scale.reshape(-1, 1) * w
        folded.append(w.astype(matmul_dtype))
        folded.append(b.astype(jnp.float32))
        s = g * jax.lax.rsqrt(rv + BN_EPS)        # [1, hidden]
        scale = s.reshape(-1)
        shift = be - rm * s
    w4, b4 = raw_params[-2], raw_params[-1]
    b4 = shift @ w4 + b4
    w4 = scale.reshape(-1, 1) * w4
    folded.append(w4.astype(matmul_dtype))
    folded.append(b4.astype(jnp.float32))
    return folded


# --------------------------------------------------------------------------
# Wrapper: batch-tiled pallas_call with VMEM-resident weights.
# --------------------------------------------------------------------------
def r1_angle_predictor_forward(x, folded_params, *, block_batch=2048):
    """x: [B, 13] float32. folded_params: output of fold_params()."""
    batch = x.shape[0]

    # Batch tile: big (default 2048) to amortize the ~0.35us/step pipeline
    # overhead, but never more than ceil(B/2) rounded to 8 sublanes so the
    # grid always has >= 2 steps (lets v7x shard the batch over its 2 TCs).
    tb = min(block_batch, _round_up(pl.cdiv(batch, 2), 8))
    tb = max(tb, 8)
    padded_b = _round_up(batch, tb)
    if padded_b != batch:
        x = jnp.pad(x, ((0, padded_b - batch), (0, 0)))
    grid = (padded_b // tb,)

    x_spec = pl.BlockSpec((tb, INPUT_SIZE), lambda i: (i, 0))
    out_spec = pl.BlockSpec((tb, OUTPUT_SIZE), lambda i: (i, 0))
    # Weights / biases: full-array blocks with a constant index_map so they are
    # fetched once and stay resident in VMEM across all batch tiles.
    param_specs = [pl.BlockSpec(p.shape, lambda i: (0, 0)) for p in folded_params]

    # f32 path must pin HIGHEST precision (default can silently drop to bf16);
    # bf16 operands use the default single-pass lowering.
    w_dtype = jnp.dtype(folded_params[0].dtype)
    precision = (lax.Precision.HIGHEST if w_dtype == jnp.dtype(jnp.float32)
                 else lax.Precision.DEFAULT)
    kernel = functools.partial(_mlp_kernel, precision=precision)

    # VMEM budget: the (tb,13) x-block and (tb,8) out-block are lane-padded to
    # 128 lanes and double-buffered (tb*1024 B each), intermediates h1/h2/h3 in
    # f32 are ~tb*2048 B, plus bf16-cast copies and ~180 KB of weights.
    vmem_est = tb * 6 * 1024 + (2 << 20)
    vmem_limit = int(min(max(vmem_est, 16 << 20), 48 << 20))  # v7x: 64 MiB/TC

    param_bytes = sum(int(p.size) * p.dtype.itemsize for p in folded_params)
    cost = pl.CostEstimate(
        flops=padded_b * _FLOPS_PER_ROW,
        transcendentals=0,
        bytes_accessed=padded_b * (INPUT_SIZE + OUTPUT_SIZE) * 4 + param_bytes,
    )

    out = pl.pallas_call(
        kernel,
        out_shape=jax.ShapeDtypeStruct((padded_b, OUTPUT_SIZE), jnp.float32),
        grid=grid,
        in_specs=[x_spec] + param_specs,
        out_specs=out_spec,
        compiler_params=pltpu.CompilerParams(
            dimension_semantics=("parallel",),   # megacore sharding on v7x
            vmem_limit_bytes=vmem_limit,
        ),
        cost_estimate=cost,
    )(x, *folded_params)

    return out[:batch]


# --------------------------------------------------------------------------
# Synthetic parameters + pure-JAX reference (unfolded, matches PyTorch eval).
# --------------------------------------------------------------------------
def init_params(key):
    sizes = [INPUT_SIZE] + HIDDEN_SIZES + [OUTPUT_SIZE]
    params = []
    for li in range(len(HIDDEN_SIZES)):
        fan_in, fan_out = sizes[li], sizes[li + 1]
        key, kw, kb, kg, kbe, krm, krv = jax.random.split(key, 7)
        bound = 1.0 / jnp.sqrt(fan_in)
        w = jax.random.uniform(kw, (fan_in, fan_out), jnp.float32, -bound, bound)
        b = jax.random.uniform(kb, (1, fan_out), jnp.float32, -bound, bound)
        # Non-trivial BN running stats so the folding is actually exercised.
        gamma = jax.random.uniform(kg, (1, fan_out), jnp.float32, 0.5, 1.5)
        beta = 0.1 * jax.random.normal(kbe, (1, fan_out), jnp.float32)
        run_mean = 0.1 * jax.random.normal(krm, (1, fan_out), jnp.float32)
        run_var = jax.random.uniform(krv, (1, fan_out), jnp.float32, 0.5, 1.5)
        params.extend([w, b, gamma, beta, run_mean, run_var])
    fan_in, fan_out = sizes[-2], sizes[-1]
    key, kw, kb = jax.random.split(key, 3)
    bound = 1.0 / jnp.sqrt(fan_in)
    w4 = jax.random.uniform(kw, (fan_in, fan_out), jnp.float32, -bound, bound)
    b4 = jax.random.uniform(kb, (1, fan_out), jnp.float32, -bound, bound)
    params.extend([w4, b4])
    return params


def reference_forward(x, raw_params):
    """Unfolded Linear -> ReLU -> BN(eval) -> Dropout(identity) reference."""
    h = x
    for li in range(len(HIDDEN_SIZES)):
        w, b, g, be, rm, rv = raw_params[6 * li: 6 * li + 6]
        h = jnp.maximum(h @ w + b, 0.0)
        h = (h - rm) / jnp.sqrt(rv + BN_EPS) * g + be
    w4, b4 = raw_params[-2], raw_params[-1]
    return h @ w4 + b4


if __name__ == "__main__":
    key = jax.random.PRNGKey(0)
    key, kx = jax.random.split(key)
    batch = 100  # small; not a multiple of 8 -> exercises padding + 2-step grid
    x = jax.random.normal(kx, (batch, INPUT_SIZE), jnp.float32)
    raw_params = init_params(key)

    ref = reference_forward(x, raw_params)

    # Default path: bf16 matmul operands (MXU-native everywhere), f32 accum.
    params_bf16 = fold_params(raw_params)            # matmul_dtype=bf16 default
    out_bf16 = jax.block_until_ready(
        r1_angle_predictor_forward(x, params_bf16))
    assert out_bf16.shape == (batch, OUTPUT_SIZE)
    assert jnp.allclose(out_bf16, ref, atol=5e-2, rtol=5e-2), (
        f"bf16 mismatch: max abs err {jnp.max(jnp.abs(out_bf16 - ref))}")

    # Optional exact path: f32 operands with pinned HIGHEST MXU precision.
    params_f32 = fold_params(raw_params, jnp.float32)
    out_f32 = jax.block_until_ready(
        r1_angle_predictor_forward(x, params_f32))
    assert out_f32.shape == (batch, OUTPUT_SIZE)
    assert jnp.allclose(out_f32, ref, atol=1e-4, rtol=1e-4), (
        f"f32 mismatch: max abs err {jnp.max(jnp.abs(out_f32 - ref))}")

    print("KERNEL_OK")
</pallas_src>

<mosaic_0001>
module attributes {stable_mosaic.version = 11 : i64} {
  func.func @_mlp_kernel(%arg0: i32, %arg1: memref<56x13xf32, #tpu.memory_space<vmem>>, %arg2: memref<13x256xbf16, #tpu.memory_space<vmem>>, %arg3: memref<1x256xf32, #tpu.memory_space<vmem>>, %arg4: memref<256x128xbf16, #tpu.memory_space<vmem>>, %arg5: memref<1x128xf32, #tpu.memory_space<vmem>>, %arg6: memref<128x64xbf16, #tpu.memory_space<vmem>>, %arg7: memref<1x64xf32, #tpu.memory_space<vmem>>, %arg8: memref<64x8xbf16, #tpu.memory_space<vmem>>, %arg9: memref<1x8xf32, #tpu.memory_space<vmem>>, %arg10: memref<56x8xf32, #tpu.memory_space<vmem>>) attributes {dimension_semantics = [#tpu.dimension_semantics<parallel>], iteration_bounds = array<i64: 2>, scalar_prefetch = 0 : i64, scratch_operands = 0 : i64, tpu.core_type = #tpu.core_type<tc>, window_params = [{transform_indices = @transform_0, window_bounds = array<i64: 56, 13>}, {pipeline_mode = #tpu.pipeline_mode<synchronous>, transform_indices = @transform_1, window_bounds = array<i64: 13, 256>}, {pipeline_mode = #tpu.pipeline_mode<synchronous>, transform_indices = @transform_2, window_bounds = array<i64: 1, 256>}, {pipeline_mode = #tpu.pipeline_mode<synchronous>, transform_indices = @transform_3, window_bounds = array<i64: 256, 128>}, {pipeline_mode = #tpu.pipeline_mode<synchronous>, transform_indices = @transform_4, window_bounds = array<i64: 1, 128>}, {pipeline_mode = #tpu.pipeline_mode<synchronous>, transform_indices = @transform_5, window_bounds = array<i64: 128, 64>}, {pipeline_mode = #tpu.pipeline_mode<synchronous>, transform_indices = @transform_6, window_bounds = array<i64: 1, 64>}, {pipeline_mode = #tpu.pipeline_mode<synchronous>, transform_indices = @transform_7, window_bounds = array<i64: 64, 8>}, {pipeline_mode = #tpu.pipeline_mode<synchronous>, transform_indices = @transform_8, window_bounds = array<i64: 1, 8>}, {transform_indices = @transform_9, window_bounds = array<i64: 56, 8>}]} {
    %c0 = arith.constant 0 : index
    %c0_0 = arith.constant 0 : index
    %0 = vector.load %arg1[%c0, %c0_0] : memref<56x13xf32, #tpu.memory_space<vmem>>, vector<56x13xf32>
    %1 = arith.truncf %0 : vector<56x13xf32> to vector<56x13xbf16>
    %c0_1 = arith.constant 0 : index
    %c0_2 = arith.constant 0 : index
    %2 = vector.load %arg2[%c0_1, %c0_2] : memref<13x256xbf16, #tpu.memory_space<vmem>>, vector<13x256xbf16>
    %cst = arith.constant dense<0.000000e+00> : vector<56x256xf32>
    %3 = tpu.matmul %1, %2, %cst {dimension_numbers = #tpu.dot_dimension_numbers<[1], [0], [0], [1], [0, 0, 1, 1], [], []>} : vector<56x13xbf16>, vector<13x256xbf16>, vector<56x256xf32> -> vector<56x256xf32>
    %c0_3 = arith.constant 0 : index
    %c0_4 = arith.constant 0 : index
    %4 = vector.load %arg3[%c0_3, %c0_4] : memref<1x256xf32, #tpu.memory_space<vmem>>, vector<1x256xf32>
    %5 = vector.broadcast %4 : vector<1x256xf32> to vector<56x256xf32>
    %6 = arith.addf %3, %5 : vector<56x256xf32>
    %cst_5 = arith.constant 0.000000e+00 : f32
    %7 = vector.broadcast %cst_5 : f32 to vector<56x256xf32>
    %8 = arith.maximumf %6, %7 : vector<56x256xf32>
    %9 = arith.truncf %8 : vector<56x256xf32> to vector<56x256xbf16>
    %c0_6 = arith.constant 0 : index
    %c0_7 = arith.constant 0 : index
    %10 = vector.load %arg4[%c0_6, %c0_7] : memref<256x128xbf16, #tpu.memory_space<vmem>>, vector<256x128xbf16>
    %cst_8 = arith.constant dense<0.000000e+00> : vector<56x128xf32>
    %11 = tpu.matmul %9, %10, %cst_8 {dimension_numbers = #tpu.dot_dimension_numbers<[1], [0], [0], [1], [0, 0, 1, 1], [], []>} : vector<56x256xbf16>, vector<256x128xbf16>, vector<56x128xf32> -> vector<56x128xf32>
    %c0_9 = arith.constant 0 : index
    %c0_10 = arith.constant 0 : index
    %12 = vector.load %arg5[%c0_9, %c0_10] : memref<1x128xf32, #tpu.memory_space<vmem>>, vector<1x128xf32>
    %13 = vector.broadcast %12 : vector<1x128xf32> to vector<56x128xf32>
    %14 = arith.addf %11, %13 : vector<56x128xf32>
    %cst_11 = arith.constant 0.000000e+00 : f32
    %15 = vector.broadcast %cst_11 : f32 to vector<56x128xf32>
    %16 = arith.maximumf %14, %15 : vector<56x128xf32>
    %17 = arith.truncf %16 : vector<56x128xf32> to vector<56x128xbf16>
    %c0_12 = arith.constant 0 : index
    %c0_13 = arith.constant 0 : index
    %18 = vector.load %arg6[%c0_12, %c0_13] : memref<128x64xbf16, #tpu.memory_space<vmem>>, vector<128x64xbf16>
    %cst_14 = arith.constant dense<0.000000e+00> : vector<56x64xf32>
    %19 = tpu.matmul %17, %18, %cst_14 {dimension_numbers = #tpu.dot_dimension_numbers<[1], [0], [0], [1], [0, 0, 1, 1], [], []>} : vector<56x128xbf16>, vector<128x64xbf16>, vector<56x64xf32> -> vector<56x64xf32>
    %c0_15 = arith.constant 0 : index
    %c0_16 = arith.constant 0 : index
    %20 = vector.load %arg7[%c0_15, %c0_16] : memref<1x64xf32, #tpu.memory_space<vmem>>, vector<1x64xf32>
    %21 = vector.broadcast %20 : vector<1x64xf32> to vector<56x64xf32>
    %22 = arith.addf %19, %21 : vector<56x64xf32>
    %cst_17 = arith.constant 0.000000e+00 : f32
    %23 = vector.broadcast %cst_17 : f32 to vector<56x64xf32>
    %24 = arith.maximumf %22, %23 : vector<56x64xf32>
    %25 = arith.truncf %24 : vector<56x64xf32> to vector<56x64xbf16>
    %c0_18 = arith.constant 0 : index
    %c0_19 = arith.constant 0 : index
    %26 = vector.load %arg8[%c0_18, %c0_19] : memref<64x8xbf16, #tpu.memory_space<vmem>>, vector<64x8xbf16>
    %cst_20 = arith.constant dense<0.000000e+00> : vector<56x8xf32>
    %27 = tpu.matmul %25, %26, %cst_20 {dimension_numbers = #tpu.dot_dimension_numbers<[1], [0], [0], [1], [0, 0, 1, 1], [], []>} : vector<56x64xbf16>, vector<64x8xbf16>, vector<56x8xf32> -> vector<56x8xf32>
    %c0_21 = arith.constant 0 : index
    %c0_22 = arith.constant 0 : index
    %28 = vector.load %arg9[%c0_21, %c0_22] : memref<1x8xf32, #tpu.memory_space<vmem>>, vector<1x8xf32>
    %29 = vector.broadcast %28 : vector<1x8xf32> to vector<56x8xf32>
    %30 = arith.addf %27, %29 : vector<56x8xf32>
    %c0_23 = arith.constant 0 : index
    %c0_24 = arith.constant 0 : index
    %31 = vector.load %arg10[%c0_23, %c0_24] : memref<56x8xf32, #tpu.memory_space<vmem>>, vector<56x8xf32>
    tpu.vector_store %arg10[%c0_23, %c0_24], %30 {strides = array<i32>} : memref<56x8xf32, #tpu.memory_space<vmem>>, vector<56x8xf32>,
    return
  }
  func.func @transform_0(%arg0: i32) -> (i32, i32) {
    %c0_i32 = arith.constant 0 : i32
    %c0_i32_0 = arith.constant 0 : i32
    return %arg0, %c0_i32 : i32, i32
  }
  func.func @transform_1(%arg0: i32) -> (i32, i32) {
    %c0_i32 = arith.constant 0 : i32
    %c0_i32_0 = arith.constant 0 : i32
    %c0_i32_1 = arith.constant 0 : i32
    return %c0_i32, %c0_i32_0 : i32, i32
  }
  func.func @transform_2(%arg0: i32) -> (i32, i32) {
    %c0_i32 = arith.constant 0 : i32
    %c0_i32_0 = arith.constant 0 : i32
    %c0_i32_1 = arith.constant 0 : i32
    return %c0_i32, %c0_i32_0 : i32, i32
  }
  func.func @transform_3(%arg0: i32) -> (i32, i32) {
    %c0_i32 = arith.constant 0 : i32
    %c0_i32_0 = arith.constant 0 : i32
    %c0_i32_1 = arith.constant 0 : i32
    return %c0_i32, %c0_i32_0 : i32, i32
  }
  func.func @transform_4(%arg0: i32) -> (i32, i32) {
    %c0_i32 = arith.constant 0 : i32
    %c0_i32_0 = arith.constant 0 : i32
    %c0_i32_1 = arith.constant 0 : i32
    return %c0_i32, %c0_i32_0 : i32, i32
  }
  func.func @transform_5(%arg0: i32) -> (i32, i32) {
    %c0_i32 = arith.constant 0 : i32
    %c0_i32_0 = arith.constant 0 : i32
    %c0_i32_1 = arith.constant 0 : i32
    return %c0_i32, %c0_i32_0 : i32, i32
  }
  func.func @transform_6(%arg0: i32) -> (i32, i32) {
    %c0_i32 = arith.constant 0 : i32
    %c0_i32_0 = arith.constant 0 : i32
    %c0_i32_1 = arith.constant 0 : i32
    return %c0_i32, %c0_i32_0 : i32, i32
  }
  func.func @transform_7(%arg0: i32) -> (i32, i32) {
    %c0_i32 = arith.constant 0 : i32
    %c0_i32_0 = arith.constant 0 : i32
    %c0_i32_1 = arith.constant 0 : i32
    return %c0_i32, %c0_i32_0 : i32, i32
  }
  func.func @transform_8(%arg0: i32) -> (i32, i32) {
    %c0_i32 = arith.constant 0 : i32
    %c0_i32_0 = arith.constant 0 : i32
    %c0_i32_1 = arith.constant 0 : i32
    return %c0_i32, %c0_i32_0 : i32, i32
  }
  func.func @transform_9(%arg0: i32) -> (i32, i32) {
    %c0_i32 = arith.constant 0 : i32
    %c0_i32_0 = arith.constant 0 : i32
    return %arg0, %c0_i32 : i32, i32
  }
}

</mosaic_0001>

<llo_original>
// kernel: tpu_custom_call.1
$region0: #{tpu_custom_call.1}
  #allocation0 [shape = 'u32[]', space=smem, size = 0x4, offset = 0x4, fixed_abs, tag = 'smem constant byte address 0x4 - core index']
  #allocation1 [shape = 'u32[72,128]{1,0:T(1,128)}', space=vmem, size = 0x9000, scoped, tag = 'internal scratch']
  %s0 = inlined_call_operand.vmem [shape: f32[112,13], index: 0, kind: input, shape index: {}]
  %s1 = inlined_call_operand.vmem [shape: bf16[13,256], index: 1, kind: input, shape index: {}]
  %s2 = inlined_call_operand.vmem [shape: f32[1,256], index: 2, kind: input, shape index: {}]
  %s3 = inlined_call_operand.vmem [shape: bf16[256,128], index: 3, kind: input, shape index: {}]
  %s4 = inlined_call_operand.vmem [shape: f32[1,128], index: 4, kind: input, shape index: {}]
  %s5 = inlined_call_operand.vmem [shape: bf16[128,64], index: 5, kind: input, shape index: {}]
  %s6 = inlined_call_operand.vmem [shape: f32[1,64], index: 6, kind: input, shape index: {}]
  %s7 = inlined_call_operand.vmem [shape: bf16[64,8], index: 7, kind: input, shape index: {}]
  %s8 = inlined_call_operand.vmem [shape: f32[1,8], index: 8, kind: input, shape index: {}]
  %s9 = inlined_call_operand.vmem [shape: f32[112,8], index: 9, kind: output, shape index: {}]
  %s10 = sld [smem:[#allocation0]]
  $region69: #{tpu_custom_call.1} parent=0
    _
  %s12 = ssub.s32 1, %s10
  %s13 = scalar_select 0, %s12, %s10
  loop: start=0, step=1, limit=4
  $region2: #{tpu_custom_call.1} parent=0 // loop_pre_header
    _
  $region3: #{tpu_custom_call.1} parent=0 // loop_header
    %s15 = sphi 0, %s19
    %p16 = scmp.ge.s32.totalorder %s15, 4
    %s25 = sphi 0, %s27
    %s28 = sphi 0, %s25
    %s29 = sphi 0, %s28
    %s45 = sphi 0, %s29
    %s49 = sphi 0, %s49
    %s51 = sphi 0, %s49
    %s52 = sphi 0, %s51
    %s66 = sphi 0, %s52
    %s70 = sphi 0, %s70
    %s72 = sphi 0, %s70
    %s73 = sphi 0, %s72
    %s87 = sphi 0, %s73
    %s91 = sphi 0, %s91
    %s93 = sphi 0, %s91
    %s94 = sphi 0, %s93
    %s108 = sphi 0, %s94
    %s112 = sphi 0, %s112
    %s114 = sphi 0, %s112
    %s115 = sphi 0, %s114
    %s129 = sphi 0, %s115
    %s133 = sphi 0, %s133
    %s135 = sphi 0, %s133
    %s136 = sphi 0, %s135
    %s150 = sphi 0, %s136
    %s154 = sphi 0, %s154
    %s156 = sphi 0, %s154
    %s157 = sphi 0, %s156
    %s171 = sphi 0, %s157
    %s175 = sphi 0, %s175
    %s177 = sphi 0, %s175
    %s178 = sphi 0, %s177
    %s192 = sphi 0, %s178
    %s196 = sphi 0, %s196
    %s198 = sphi 0, %s196
    %s199 = sphi 0, %s198
    %s213 = sphi 0, %s199
    %s219 = sphi 0, %s221
    %s222 = sphi 0, %s219
    %s223 = sphi 0, %s222
    %s239 = sphi 0, %s223
  $region4: #{tpu_custom_call.1} parent=0 // loop_header_branch
    %18 = sbr.rel (%p16) target = $region8
  $region5: #{tpu_custom_call.1} parent=0 // loop_body
    %s20 = ssub.s32 %s15, 1
    %s21 = ssub.s32 %s15, 2
    %s22 = sadd.s32 %s15, 1
    %s23 = ssub.s32 %s15, %s22
    %p24 = scmp.eq.s32.totalorder %s23, 0
    %s26 = sadd.s32 %s25, 1
    %s27 = scalar_select %p24, %s25, %s26
    %p30 = pneg %p24
    %p31 = scmp.eq.s32.totalorder %s15, 1
    %p32 = por %p30, %p31
    %p33 = scmp.ne.s32.totalorder %s25, %s28
    %p34 = scmp.eq.s32.totalorder %s15, 0
    %p35 = por %p33, %p34
    %p36 = scmp.ne.s32.totalorder %s25, %s28
    %p37 = scmp.eq.s32.totalorder %s20, 1
    %p38 = por %p36, %p37
    %p39 = scmp.ne.s32.totalorder %s28, %s29
    %p40 = scmp.eq.s32.totalorder %s20, 0
    %p41 = por %p39, %p40
    %p42 = scmp.ne.s32.totalorder %s28, %s29
    %p43 = scmp.eq.s32.totalorder %s21, 1
    %p44 = por %p42, %p43
    %p46 = scmp.ne.s32.totalorder %s29, %s45
    %p47 = scmp.eq.s32.totalorder %s21, 0
    %p48 = por %p46, %p47
    %s50 = sadd.s32 %s49, 1
    %p53 = scmp.eq.s32.totalorder %s15, 1
    %p54 = scmp.ne.s32.totalorder %s49, %s51
    %p55 = scmp.eq.s32.totalorder %s15, 0
    %p56 = por %p54, %p55
    %p57 = scmp.ne.s32.totalorder %s49, %s51
    %p58 = scmp.eq.s32.totalorder %s20, 1
    %p59 = por %p57, %p58
    %p60 = scmp.ne.s32.totalorder %s51, %s52
    %p61 = scmp.eq.s32.totalorder %s20, 0
    %p62 = por %p60, %p61
    %p63 = scmp.ne.s32.totalorder %s51, %s52
    %p64 = scmp.eq.s32.totalorder %s21, 1
    %p65 = por %p63, %p64
    %p67 = scmp.ne.s32.totalorder %s52, %s66
    %p68 = scmp.eq.s32.totalorder %s21, 0
    %p69 = por %p67, %p68
    %s71 = sadd.s32 %s70, 1
    %p74 = scmp.eq.s32.totalorder %s15, 1
    %p75 = scmp.ne.s32.totalorder %s70, %s72
    %p76 = scmp.eq.s32.totalorder %s15, 0
    %p77 = por %p75, %p76
    %p78 = scmp.ne.s32.totalorder %s70, %s72
    %p79 = scmp.eq.s32.totalorder %s20, 1
    %p80 = por %p78, %p79
    %p81 = scmp.ne.s32.totalorder %s72, %s73
    %p82 = scmp.eq.s32.totalorder %s20, 0
    %p83 = por %p81, %p82
    %p84 = scmp.ne.s32.totalorder %s72, %s73
    %p85 = scmp.eq.s32.totalorder %s21, 1
    %p86 = por %p84, %p85
    %p88 = scmp.ne.s32.totalorder %s73, %s87
    %p89 = scmp.eq.s32.totalorder %s21, 0
    %p90 = por %p88, %p89
    %s92 = sadd.s32 %s91, 1
    %p95 = scmp.eq.s32.totalorder %s15, 1
    %p96 = scmp.ne.s32.totalorder %s91, %s93
    %p97 = scmp.eq.s32.totalorder %s15, 0
    %p98 = por %p96, %p97
    %p99 = scmp.ne.s32.totalorder %s91, %s93
    %p100 = scmp.eq.s32.totalorder %s20, 1
    %p101 = por %p99, %p100
    %p102 = scmp.ne.s32.totalorder %s93, %s94
    %p103 = scmp.eq.s32.totalorder %s20, 0
    %p104 = por %p102, %p103
    %p105 = scmp.ne.s32.totalorder %s93, %s94
    %p106 = scmp.eq.s32.totalorder %s21, 1
    %p107 = por %p105, %p106
    %p109 = scmp.ne.s32.totalorder %s94, %s108
    %p110 = scmp.eq.s32.totalorder %s21, 0
    %p111 = por %p109, %p110
    %s113 = sadd.s32 %s112, 1
    %p116 = scmp.eq.s32.totalorder %s15, 1
    %p117 = scmp.ne.s32.totalorder %s112, %s114
    %p118 = scmp.eq.s32.totalorder %s15, 0
    %p119 = por %p117, %p118
    %p120 = scmp.ne.s32.totalorder %s112, %s114
    %p121 = scmp.eq.s32.totalorder %s20, 1
    %p122 = por %p120, %p121
    %p123 = scmp.ne.s32.totalorder %s114, %s115
    %p124 = scmp.eq.s32.totalorder %s20, 0
    %p125 = por %p123, %p124
    %p126 = scmp.ne.s32.totalorder %s114, %s115
    %p127 = scmp.eq.s32.totalorder %s21, 1
    %p128 = por %p126, %p127
    %p130 = scmp.ne.s32.totalorder %s115, %s129
    %p131 = scmp.eq.s32.totalorder %s21, 0
    %p132 = por %p130, %p131
    %s134 = sadd.s32 %s133, 1
    %p137 = scmp.eq.s32.totalorder %s15, 1
    %p138 = scmp.ne.s32.totalorder %s133, %s135
    %p139 = scmp.eq.s32.totalorder %s15, 0
    %p140 = por %p138, %p139
    %p141 = scmp.ne.s32.totalorder %s133, %s135
    %p142 = scmp.eq.s32.totalorder %s20, 1
    %p143 = por %p141, %p142
    %p144 = scmp.ne.s32.totalorder %s135, %s136
    %p145 = scmp.eq.s32.totalorder %s20, 0
    %p146 = por %p144, %p145
    %p147 = scmp.ne.s32.totalorder %s135, %s136
    %p148 = scmp.eq.s32.totalorder %s21, 1
    %p149 = por %p147, %p148
    %p151 = scmp.ne.s32.totalorder %s136, %s150
    %p152 = scmp.eq.s32.totalorder %s21, 0
    %p153 = por %p151, %p152
    %s155 = sadd.s32 %s154, 1
    %p158 = scmp.eq.s32.totalorder %s15, 1
    %p159 = scmp.ne.s32.totalorder %s154, %s156
    %p160 = scmp.eq.s32.totalorder %s15, 0
    %p161 = por %p159, %p160
    %p162 = scmp.ne.s32.totalorder %s154, %s156
    %p163 = scmp.eq.s32.totalorder %s20, 1
    %p164 = por %p162, %p163
    %p165 = scmp.ne.s32.totalorder %s156, %s157
    %p166 = scmp.eq.s32.totalorder %s20, 0
    %p167 = por %p165, %p166
    %p168 = scmp.ne.s32.totalorder %s156, %s157
    %p169 = scmp.eq.s32.totalorder %s21, 1
    %p170 = por %p168, %p169
    %p172 = scmp.ne.s32.totalorder %s157, %s171
    %p173 = scmp.eq.s32.totalorder %s21, 0
    %p174 = por %p172, %p173
    %s176 = sadd.s32 %s175, 1
    %p179 = scmp.eq.s32.totalorder %s15, 1
    %p180 = scmp.ne.s32.totalorder %s175, %s177
    %p181 = scmp.eq.s32.totalorder %s15, 0
    %p182 = por %p180, %p181
    %p183 = scmp.ne.s32.totalorder %s175, %s177
    %p184 = scmp.eq.s32.totalorder %s20, 1
    %p185 = por %p183, %p184
    %p186 = scmp.ne.s32.totalorder %s177, %s178
    %p187 = scmp.eq.s32.totalorder %s20, 0
    %p188 = por %p186, %p187
    %p189 = scmp.ne.s32.totalorder %s177, %s178
    %p190 = scmp.eq.s32.totalorder %s21, 1
    %p191 = por %p189, %p190
    %p193 = scmp.ne.s32.totalorder %s178, %s192
    %p194 = scmp.eq.s32.totalorder %s21, 0
    %p195 = por %p193, %p194
    %s197 = sadd.s32 %s196, 1
    %p200 = scmp.eq.s32.totalorder %s15, 1
    %p201 = scmp.ne.s32.totalorder %s196, %s198
    %p202 = scmp.eq.s32.totalorder %s15, 0
    %p203 = por %p201, %p202
    %p204 = scmp.ne.s32.totalorder %s196, %s198
    %p205 = scmp.eq.s32.totalorder %s20, 1
    %p206 = por %p204, %p205
    %p207 = scmp.ne.s32.totalorder %s198, %s199
    %p208 = scmp.eq.s32.totalorder %s20, 0
    %p209 = por %p207, %p208
    %p210 = scmp.ne.s32.totalorder %s198, %s199
    %p211 = scmp.eq.s32.totalorder %s21, 1
    %p212 = por %p210, %p211
    %p214 = scmp.ne.s32.totalorder %s199, %s213
    %p215 = scmp.eq.s32.totalorder %s21, 0
    %p216 = por %p214, %p215
    %s217 = ssub.s32 %s15, %s22
    %p218 = scmp.eq.s32.totalorder %s217, 0
    %s220 = sadd.s32 %s219, 1
    %s221 = scalar_select %p218, %s219, %s220
    %p224 = pneg %p218
    %p225 = scmp.eq.s32.totalorder %s15, 1
    %p226 = por %p224, %p225
    %p227 = scmp.ne.s32.totalorder %s219, %s222
    %p228 = scmp.eq.s32.totalorder %s15, 0
    %p229 = por %p227, %p228
    %p230 = scmp.ne.s32.totalorder %s219, %s222
    %p231 = scmp.eq.s32.totalorder %s20, 1
    %p232 = por %p230, %p231
    %p233 = scmp.ne.s32.totalorder %s222, %s223
    %p234 = scmp.eq.s32.totalorder %s20, 0
    %p235 = por %p233, %p234
    %p236 = scmp.ne.s32.totalorder %s222, %s223
    %p237 = scmp.eq.s32.totalorder %s21, 1
    %p238 = por %p236, %p237
    %p240 = scmp.ne.s32.totalorder %s223, %s239
    %p241 = scmp.eq.s32.totalorder %s21, 0
    %p242 = por %p240, %p241
    %p243 = scmp.le.s32.totalorder 1, %s15
    %p244 = scmp.lt.s32.totalorder %s15, 3
    %p245 = pnand %p243, %p244
    %p246 = pneg %p245
    // Predicated region
    $region9: #{tpu_custom_call.1} parent=5 // pred_check
      _
    $region10: #{tpu_custom_call.1} parent=5 // pred_check_branch
      %248 = sbr.rel (%p245) target = $region12
    $region11: #{tpu_custom_call.1} parent=5 // pred_region
      %s249 = ssub.s32 %s15, 1
      // Predicated region
      $region13: #{tpu_custom_call.1} parent=11 // pred_check
        %p250 = pneg %p62
      $region14: #{tpu_custom_call.1} parent=11 // pred_check_branch
        %252 = sbr.rel (%p250) target = $region16
      $region15: #{tpu_custom_call.1} parent=11 // pred_region
        _
      $region16: #{tpu_custom_call.1} parent=11 // pred_fallthru
        _
      // Predicated region
      $region17: #{tpu_custom_call.1} parent=11 // pred_check
        %p253 = pneg %p83
      $region18: #{tpu_custom_call.1} parent=11 // pred_check_branch
        %255 = sbr.rel (%p253) target = $region20
      $region19: #{tpu_custom_call.1} parent=11 // pred_region
        _
      $region20: #{tpu_custom_call.1} parent=11 // pred_fallthru
        _
      // Predicated region
      $region21: #{tpu_custom_call.1} parent=11 // pred_check
        %p256 = pneg %p104
      $region22: #{tpu_custom_call.1} parent=11 // pred_check_branch
        %258 = sbr.rel (%p256) target = $region24
      $region23: #{tpu_custom_call.1} parent=11 // pred_region
        _
      $region24: #{tpu_custom_call.1} parent=11 // pred_fallthru
        _
      // Predicated region
      $region25: #{tpu_custom_call.1} parent=11 // pred_check
        %p259 = pneg %p125
      $region26: #{tpu_custom_call.1} parent=11 // pred_check_branch
        %261 = sbr.rel (%p259) target = $region28
      $region27: #{tpu_custom_call.1} parent=11 // pred_region
        _
      $region28: #{tpu_custom_call.1} parent=11 // pred_fallthru
        _
      // Predicated region
      $region29: #{tpu_custom_call.1} parent=11 // pred_check
        %p262 = pneg %p146
      $region30: #{tpu_custom_call.1} parent=11 // pred_check_branch
        %264 = sbr.rel (%p262) target = $region32
      $region31: #{tpu_custom_call.1} parent=11 // pred_region
        _
      $region32: #{tpu_custom_call.1} parent=11 // pred_fallthru
        _
      // Predicated region
      $region33: #{tpu_custom_call.1} parent=11 // pred_check
        %p265 = pneg %p167
      $region34: #{tpu_custom_call.1} parent=11 // pred_check_branch
        %267 = sbr.rel (%p265) target = $region36
      $region35: #{tpu_custom_call.1} parent=11 // pred_region
        _
      $region36: #{tpu_custom_call.1} parent=11 // pred_fallthru
        _
      // Predicated region
      $region37: #{tpu_custom_call.1} parent=11 // pred_check
        %p268 = pneg %p188
      $region38: #{tpu_custom_call.1} parent=11 // pred_check_branch
        %270 = sbr.rel (%p268) target = $region40
      $region39: #{tpu_custom_call.1} parent=11 // pred_region
        _
      $region40: #{tpu_custom_call.1} parent=11 // pred_fallthru
        _
      // Predicated region
      $region41: #{tpu_custom_call.1} parent=11 // pred_check
        %p271 = pneg %p209
      $region42: #{tpu_custom_call.1} parent=11 // pred_check_branch
        %273 = sbr.rel (%p271) target = $region44
      $region43: #{tpu_custom_call.1} parent=11 // pred_region
        _
      $region44: #{tpu_custom_call.1} parent=11 // pred_fallthru
        _
    $region12: #{tpu_custom_call.1} parent=5 // pred_fallthru
      _
    %p274 = scmp.lt.s32.totalorder %s15, 2
    // Predicated region
    $region45: #{tpu_custom_call.1} parent=5 // pred_check
      %p275 = pneg %p274
    $region46: #{tpu_custom_call.1} parent=5 // pred_check_branch
      %277 = sbr.rel (%p275) target = $region48
    $region47: #{tpu_custom_call.1} parent=5 // pred_region
      // Predicated region
      $region49: #{tpu_custom_call.1} parent=47 // pred_check
        %p278 = pneg %p35
      $region50: #{tpu_custom_call.1} parent=47 // pred_check_branch
        %280 = sbr.rel (%p278) target = $region52
      $region51: #{tpu_custom_call.1} parent=47 // pred_region
        %s281 = smul.u32 7, %s15
        %p282 = scmp.lt.s32.totalorder %s281, 13
        %s283 = scalar_select %p282, %s281, 13
        %s284 = smul.addr %s283, 8
        %s285 = scalar_lea.vmem %s0, %s284
        %s286 = smul.u32 7, %s15
      $region52: #{tpu_custom_call.1} parent=47 // pred_fallthru
        _
    $region48: #{tpu_custom_call.1} parent=5 // pred_fallthru
      _
    %p287 = scmp.le.s32.totalorder 1, %s15
    %p288 = scmp.lt.s32.totalorder %s15, 3
    %p289 = pnand %p287, %p288
    %p290 = pneg %p289
    // Predicated region
    $region53: #{tpu_custom_call.1} parent=5 // pred_check
      _
    $region54: #{tpu_custom_call.1} parent=5 // pred_check_branch
      %292 = sbr.rel (%p289) target = $region56
    $region55: #{tpu_custom_call.1} parent=5 // pred_region
      %s293 = ssub.s32 %s15, 1
      %s294 = smul.u32 7, %s20
      %p295 = scmp.lt.s32.totalorder %s294, 13
      %s296 = scalar_select %p295, %s294, 13
      %s297 = smul.addr %s296, 8
      %s298 = scalar_lea.vmem %s0, %s297
      %p299 = pneg %p41
      %p300 = pneg %p38
      %p301 = pneg %p62
      %p302 = pneg %p59
      %p303 = pneg %p83
      %p304 = pneg %p80
      %p305 = pneg %p104
      %p306 = pneg %p101
      %p307 = pneg %p125
      %p308 = pneg %p122
      %p309 = pneg %p146
      %p310 = pneg %p143
      %p311 = pneg %p167
      %p312 = pneg %p164
      %p313 = pneg %p188
      %p314 = pneg %p185
      %p315 = pneg %p209
      %p316 = pneg %p206
      %p317 = pneg %p235
      %p318 = pneg %p232
      %s319 = smul.u32 7, %s20
      %p320 = scmp.lt.s32.totalorder %s319, 13
      %s321 = scalar_select %p320, %s319, 13
      %s322 = smul.addr %s321, 8
      %s323 = scalar_lea.vmem %s9, %s322
      %s324 = smul.u32 7, %s20
      %p325 = scmp.lt.s32.totalorder %s324, 13
      %s326 = scalar_select %p325, %s324, 13
      %s327 = smul.addr %s326, 8
      %s328 = scalar_lea.vmem %s0, %s327
      %s329 = smul.u32 7, %s20
      %s330 = smul.u32 7, %s20
      %p331 = scmp.lt.s32.totalorder %s330, 13
      %s332 = scalar_select %p331, %s330, 13
      %s333 = smul.addr %s332, 8
      %s334 = scalar_lea.vmem %s9, %s333
      %s335 = smul.u32 7, %s20
      %v337 = vld [vmem:[%s328] sm:$0xff]
      %v338 = vld [vmem:[%s328 + $0x8] sm:$0xff]
      %v339 = vld [vmem:[%s328 + $0x10] sm:$0xff]
      %v340 = vld [vmem:[%s328 + $0x18] sm:$0xff]
      %v341 = vld [vmem:[%s328 + $0x20] sm:$0xff]
      %v342 = vld [vmem:[%s328 + $0x28] sm:$0xff]
      %v343 = vld [vmem:[%s328 + $0x30] sm:$0xff]
      %v344 = vpack.c.bf16 %v338, %v337
      %v345 = vpack.c.bf16 %v340, %v339
      %v346 = vpack.c.bf16 %v342, %v341
      %v347 = vpack.c.bf16 %v343, %v343
      %v348 = vld [vmem:[%s1] sm:$0xff]
      %v349 = vld [vmem:[%s1 + $0x8] sm:$0x77]
      %v350 = vld [vmem:[%s2] sm:$0x3]
      %v352 = vperm.slane %v350, 0
      %v353 = vperm.slane %v350, 1
      %v358 = vunpack.c.l.b16 %v348
      %v359 = vunpack.c.h.b16 %v348
      %v360 = vunpack.c.l.b16 %v349
      %v361 = vunpack.c.h.b16 %v349
      %v362 = vpack.c.b16 %v360, %v358
      %v363 = vpack.c.b16 %v361, %v359
      %vm364 = vcmask 105472
      %v366 = vsel %vm364, %v344, 0
      %v369 = vsel %vm364, %v345, 0
      %v372 = vsel %vm364, %v346, 0
      %v375 = vsel %vm364, %v347, 0
      %vm377 = vcmask 1045504
      %vm378 = vcmask 1046528
      %v379 = vsel %vm377, 4294967295, 65535
      %v380 = vsel %vm378, %v379, 0
      %v382 = vand.u32 %v362, %v380
      %v385 = vand.u32 %v363, %v380
      %387 = vmatpush.bf16.msra.mxu0 0
      %388 = vmatpush.bf16.msra.mxu0 0
      %389 = vmatpush.bf16.msra.mxu0 0
      %390 = vmatpush.bf16.msra.mxu0 0
      %391 = vmatpush.bf16.msra.mxu0 0
      %392 = vmatpush.bf16.msra.mxu0 0
      %393 = vmatpush.bf16.msra.mxu0 0
      %394 = vmatpush.bf16.msra.mxu0 %v382
      %395 = vmatmul.bf16.gmra.mxu0 %v366
      %v396 = vpop.f32.mrf.mxu0
      %v397 = vadd.f32 %v352, %v396
      %v398 = vpop.f32.mrf.mxu0
      %v399 = vadd.f32 %v352, %v398
      %400 = vmatmul.bf16.gmra.mxu0 %v369
      %v401 = vpop.f32.mrf.mxu0
      %v402 = vadd.f32 %v352, %v401
      %v403 = vpop.f32.mrf.mxu0
      %v404 = vadd.f32 %v352, %v403
      %405 = vmatmul.bf16.gmra.mxu0 %v372
      %v406 = vpop.f32.mrf.mxu0
      %v407 = vadd.f32 %v352, %v406
      %v408 = vpop.f32.mrf.mxu0
      %v409 = vadd.f32 %v352, %v408
      %410 = vmatmul.bf16.gmra.mxu0 %v375
      %v411 = vpop.f32.mrf.mxu0
      %v412 = vadd.f32 %v352, %v411
      %v413 = vpop.f32.mrf.mxu0
      %414 = vdwg.mxu0
      %415 = vmatpush.bf16.msra.mxu0 0
      %416 = vmatpush.bf16.msra.mxu0 0
      %417 = vmatpush.bf16.msra.mxu0 0
      %418 = vmatpush.bf16.msra.mxu0 0
      %419 = vmatpush.bf16.msra.mxu0 0
      %420 = vmatpush.bf16.msra.mxu0 0
      %421 = vmatpush.bf16.msra.mxu0 0
      %422 = vmatpush.bf16.msra.mxu0 %v385
      %423 = vmatmul.bf16.gmra.mxu0 %v366
      %v424 = vpop.f32.mrf.mxu0
      %v425 = vadd.f32 %v353, %v424
      %v426 = vpop.f32.mrf.mxu0
      %v427 = vadd.f32 %v353, %v426
      %428 = vmatmul.bf16.gmra.mxu0 %v369
      %v429 = vpop.f32.mrf.mxu0
      %v430 = vadd.f32 %v353, %v429
      %v431 = vpop.f32.mrf.mxu0
      %v432 = vadd.f32 %v353, %v431
      %433 = vmatmul.bf16.gmra.mxu0 %v372
      %v434 = vpop.f32.mrf.mxu0
      %v435 = vadd.f32 %v353, %v434
      %v436 = vpop.f32.mrf.mxu0
      %v437 = vadd.f32 %v353, %v436
      %438 = vmatmul.bf16.gmra.mxu0 %v375
      %v439 = vpop.f32.mrf.mxu0
      %v440 = vadd.f32 %v353, %v439
      %v441 = vpop.f32.mrf.mxu0
      %442 = vdwg.mxu0
      %v443 = vmax.f32 %v397, 0.0
      %v444 = vmax.f32 %v425, 0.0
      %v445 = vmax.f32 %v399, 0.0
      %v446 = vmax.f32 %v427, 0.0
      %v447 = vmax.f32 %v402, 0.0
      %v448 = vmax.f32 %v430, 0.0
      %v449 = vmax.f32 %v404, 0.0
      %v450 = vmax.f32 %v432, 0.0
      %v451 = vmax.f32 %v407, 0.0
      %v452 = vmax.f32 %v435, 0.0
      %v453 = vmax.f32 %v409, 0.0
      %v454 = vmax.f32 %v437, 0.0
      %v455 = vmax.f32 %v412, 0.0
      %v456 = vmax.f32 %v440, 0.0
      %v457 = vpack.c.bf16 %v445, %v443
      %v458 = vpack.c.bf16 %v446, %v444
      %v459 = vpack.c.bf16 %v449, %v447
      %v460 = vpack.c.bf16 %v450, %v448
      %v461 = vpack.c.bf16 %v453, %v451
      %v462 = vpack.c.bf16 %v454, %v452
      %v463 = vpack.c.bf16 %v455, %v455
      %v464 = vpack.c.bf16 %v456, %v456
      %v465 = vld [vmem:[%s3] sm:$0xf]
      %v466 = vld [vmem:[%s3 + $0x4] sm:$0xf]
      %v467 = vld [vmem:[%s3 + $0x8] sm:$0xf]
      %v468 = vld [vmem:[%s3 + $0xc] sm:$0xf]
      %v469 = vld [vmem:[%s3 + $0x10] sm:$0xf]
      %v470 = vld [vmem:[%s3 + $0x14] sm:$0xf]
      %v471 = vld [vmem:[%s3 + $0x18] sm:$0xf]
      %v472 = vld [vmem:[%s3 + $0x1c] sm:$0xf]
      %v473 = vld [vmem:[%s3 + $0x20] sm:$0xf]
      %v474 = vld [vmem:[%s3 + $0x24] sm:$0xf]
      %v475 = vld [vmem:[%s3 + $0x28] sm:$0xf]
      %v476 = vld [vmem:[%s3 + $0x2c] sm:$0xf]
      %v477 = vld [vmem:[%s3 + $0x30] sm:$0xf]
      %v478 = vld [vmem:[%s3 + $0x34] sm:$0xf]
      %v479 = vld [vmem:[%s3 + $0x38] sm:$0xf]
      %v480 = vld [vmem:[%s3 + $0x3c] sm:$0xf]
      %v481 = vld [vmem:[%s3 + $0x40] sm:$0xf]
      %v482 = vld [vmem:[%s3 + $0x44] sm:$0xf]
      %v483 = vld [vmem:[%s3 + $0x48] sm:$0xf]
      %v484 = vld [vmem:[%s3 + $0x4c] sm:$0xf]
      %v485 = vld [vmem:[%s3 + $0x50] sm:$0xf]
      %v486 = vld [vmem:[%s3 + $0x54] sm:$0xf]
      %v487 = vld [vmem:[%s3 + $0x58] sm:$0xf]
      %v488 = vld [vmem:[%s3 + $0x5c] sm:$0xf]
      %v489 = vld [vmem:[%s3 + $0x60] sm:$0xf]
      %v490 = vld [vmem:[%s3 + $0x64] sm:$0xf]
      %v491 = vld [vmem:[%s3 + $0x68] sm:$0xf]
      %v492 = vld [vmem:[%s3 + $0x6c] sm:$0xf]
      %v493 = vld [vmem:[%s3 + $0x70] sm:$0xf]
      %v494 = vld [vmem:[%s3 + $0x74] sm:$0xf]
      %v495 = vld [vmem:[%s3 + $0x78] sm:$0xf]
      %v496 = vld [vmem:[%s3 + $0x7c] sm:$0xf]
      %v497 = vld [vmem:[%s4] sm:$0x1]
      %v499 = vperm.slane %v497, 0
      %v533 = vunpack.c.l.b16 %v465
      %v534 = vunpack.c.l.b16 %v466
      %v535 = vunpack.c.l.b16 %v467
      %v536 = vunpack.c.l.b16 %v468
      %v537 = vunpack.c.l.b16 %v469
      %v538 = vunpack.c.l.b16 %v470
      %v539 = vunpack.c.l.b16 %v471
      %v540 = vunpack.c.l.b16 %v472
      %v541 = vunpack.c.l.b16 %v473
      %v542 = vunpack.c.l.b16 %v474
      %v543 = vunpack.c.l.b16 %v475
      %v544 = vunpack.c.l.b16 %v476
      %v545 = vunpack.c.l.b16 %v477
      %v546 = vunpack.c.l.b16 %v478
      %v547 = vunpack.c.l.b16 %v479
      %v548 = vunpack.c.l.b16 %v480
      %v549 = vunpack.c.l.b16 %v481
      %v550 = vunpack.c.l.b16 %v482
      %v551 = vunpack.c.l.b16 %v483
      %v552 = vunpack.c.l.b16 %v484
      %v553 = vunpack.c.l.b16 %v485
      %v554 = vunpack.c.l.b16 %v486
      %v555 = vunpack.c.l.b16 %v487
      %v556 = vunpack.c.l.b16 %v488
      %v557 = vunpack.c.l.b16 %v489
      %v558 = vunpack.c.l.b16 %v490
      %v559 = vunpack.c.l.b16 %v491
      %v560 = vunpack.c.l.b16 %v492
      %v561 = vunpack.c.l.b16 %v493
      %v562 = vunpack.c.l.b16 %v494
      %v563 = vunpack.c.l.b16 %v495
      %v564 = vunpack.c.l.b16 %v496
      %v565 = vpack.c.b16 %v534, %v533
      %v566 = vpack.c.b16 %v536, %v535
      %v567 = vpack.c.b16 %v538, %v537
      %v568 = vpack.c.b16 %v540, %v539
      %v569 = vpack.c.b16 %v542, %v541
      %v570 = vpack.c.b16 %v544, %v543
      %v571 = vpack.c.b16 %v546, %v545
      %v572 = vpack.c.b16 %v548, %v547
      %v573 = vpack.c.b16 %v550, %v549
      %v574 = vpack.c.b16 %v552, %v551
      %v575 = vpack.c.b16 %v554, %v553
      %v576 = vpack.c.b16 %v556, %v555
      %v577 = vpack.c.b16 %v558, %v557
      %v578 = vpack.c.b16 %v560, %v559
      %v579 = vpack.c.b16 %v562, %v561
      %v580 = vpack.c.b16 %v564, %v563
      %597 = vmatpush.bf16.msra.mxu0 %v572
      %598 = vmatpush.bf16.msra.mxu0 %v571
      %599 = vmatpush.bf16.msra.mxu0 %v570
      %600 = vmatpush.bf16.msra.mxu0 %v569
      %601 = vmatpush.bf16.msra.mxu0 %v568
      %602 = vmatpush.bf16.msra.mxu0 %v567
      %603 = vmatpush.bf16.msra.mxu0 %v566
      %604 = vmatpush.bf16.msra.mxu0 %v565
      %605 = vmatmul.bf16.gmra.mxu0 %v457
      %v606 = vpop.f32.mrf.mxu0
      %v607 = vadd.f32 %v499, %v606
      %v608 = vpop.f32.mrf.mxu0
      %v609 = vadd.f32 %v499, %v608
      %610 = vmatmul.bf16.gmra.mxu0 %v459
      %v611 = vpop.f32.mrf.mxu0
      %v612 = vadd.f32 %v499, %v611
      %v613 = vpop.f32.mrf.mxu0
      %v614 = vadd.f32 %v499, %v613
      %615 = vmatmul.bf16.gmra.mxu0 %v461
      %v616 = vpop.f32.mrf.mxu0
      %v617 = vadd.f32 %v499, %v616
      %v618 = vpop.f32.mrf.mxu0
      %v619 = vadd.f32 %v499, %v618
      %620 = vmatmul.bf16.gmra.mxu0 %v463
      %v621 = vpop.f32.mrf.mxu0
      %v622 = vadd.f32 %v499, %v621
      %v623 = vpop.f32.mrf.mxu0
      %624 = vdwg.mxu0
      %625 = vmatpush.bf16.msra.mxu0 %v580
      %626 = vmatpush.bf16.msra.mxu0 %v579
      %627 = vmatpush.bf16.msra.mxu0 %v578
      %628 = vmatpush.bf16.msra.mxu0 %v577
      %629 = vmatpush.bf16.msra.mxu0 %v576
      %630 = vmatpush.bf16.msra.mxu0 %v575
      %631 = vmatpush.bf16.msra.mxu0 %v574
      %632 = vmatpush.bf16.msra.mxu0 %v573
      %633 = vmatmul.bf16.gmra.mxu0 %v458
      %v634 = vpop.f32.mrf.mxu0
      %v635 = vadd.f32 %v607, %v634
      %v636 = vpop.f32.mrf.mxu0
      %v637 = vadd.f32 %v609, %v636
      %638 = vmatmul.bf16.gmra.mxu0 %v460
      %v639 = vpop.f32.mrf.mxu0
      %v640 = vadd.f32 %v612, %v639
      %v641 = vpop.f32.mrf.mxu0
      %v642 = vadd.f32 %v614, %v641
      %643 = vmatmul.bf16.gmra.mxu0 %v462
      %v644 = vpop.f32.mrf.mxu0
      %v645 = vadd.f32 %v617, %v644
      %v646 = vpop.f32.mrf.mxu0
      %v647 = vadd.f32 %v619, %v646
      %648 = vmatmul.bf16.gmra.mxu0 %v464
      %v649 = vpop.f32.mrf.mxu0
      %v650 = vadd.f32 %v622, %v649
      %v651 = vpop.f32.mrf.mxu0
      %652 = vdwg.mxu0
      %v653 = vmax.f32 %v635, 0.0
      %v654 = vmax.f32 %v637, 0.0
      %v655 = vmax.f32 %v640, 0.0
      %v656 = vmax.f32 %v642, 0.0
      %v657 = vmax.f32 %v645, 0.0
      %v658 = vmax.f32 %v647, 0.0
      %v659 = vmax.f32 %v650, 0.0
      %v660 = vpack.c.bf16 %v654, %v653
      %v661 = vpack.c.bf16 %v656, %v655
      %v662 = vpack.c.bf16 %v658, %v657
      %v663 = vpack.c.bf16 %v659, %v659
      %v664 = vld [vmem:[%s5] sm:$0xf]
      %v665 = vld [vmem:[%s5 + $0x4] sm:$0xf]
      %v666 = vld [vmem:[%s5 + $0x8] sm:$0xf]
      %v667 = vld [vmem:[%s5 + $0xc] sm:$0xf]
      %v668 = vld [vmem:[%s5 + $0x10] sm:$0xf]
      %v669 = vld [vmem:[%s5 + $0x14] sm:$0xf]
      %v670 = vld [vmem:[%s5 + $0x18] sm:$0xf]
      %v671 = vld [vmem:[%s5 + $0x1c] sm:$0xf]
      %v672 = vld [vmem:[%s5 + $0x20] sm:$0xf]
      %v673 = vld [vmem:[%s5 + $0x24] sm:$0xf]
      %v674 = vld [vmem:[%s5 + $0x28] sm:$0xf]
      %v675 = vld [vmem:[%s5 + $0x2c] sm:$0xf]
      %v676 = vld [vmem:[%s5 + $0x30] sm:$0xf]
      %v677 = vld [vmem:[%s5 + $0x34] sm:$0xf]
      %v678 = vld [vmem:[%s5 + $0x38] sm:$0xf]
      %v679 = vld [vmem:[%s5 + $0x3c] sm:$0xf]
      %v680 = vld [vmem:[%s6] sm:$0x1]
      %v682 = vperm.slane %v680, 0
      %v700 = vunpack.c.l.b16 %v664
      %v701 = vunpack.c.l.b16 %v665
      %v702 = vunpack.c.l.b16 %v666
      %v703 = vunpack.c.l.b16 %v667
      %v704 = vunpack.c.l.b16 %v668
      %v705 = vunpack.c.l.b16 %v669
      %v706 = vunpack.c.l.b16 %v670
      %v707 = vunpack.c.l.b16 %v671
      %v708 = vunpack.c.l.b16 %v672
      %v709 = vunpack.c.l.b16 %v673
      %v710 = vunpack.c.l.b16 %v674
      %v711 = vunpack.c.l.b16 %v675
      %v712 = vunpack.c.l.b16 %v676
      %v713 = vunpack.c.l.b16 %v677
      %v714 = vunpack.c.l.b16 %v678
      %v715 = vunpack.c.l.b16 %v679
      %v716 = vpack.c.b16 %v701, %v700
      %v717 = vpack.c.b16 %v703, %v702
      %v718 = vpack.c.b16 %v705, %v704
      %v719 = vpack.c.b16 %v707, %v706
      %v720 = vpack.c.b16 %v709, %v708
      %v721 = vpack.c.b16 %v711, %v710
      %v722 = vpack.c.b16 %v713, %v712
      %v723 = vpack.c.b16 %v715, %v714
      %732 = vmatpush.bf16.msra.mxu0 %v723
      %733 = vmatpush.bf16.msra.mxu0 %v722
      %734 = vmatpush.bf16.msra.mxu0 %v721
      %735 = vmatpush.bf16.msra.mxu0 %v720
      %736 = vmatpush.bf16.msra.mxu0 %v719
      %737 = vmatpush.bf16.msra.mxu0 %v718
      %738 = vmatpush.bf16.msra.mxu0 %v717
      %739 = vmatpush.bf16.msra.mxu0 %v716
      %740 = vmatmul.bf16.gmra.mxu0 %v660
      %v741 = vpop.f32.mrf.mxu0
      %v742 = vadd.f32 %v682, %v741
      %v743 = vpop.f32.mrf.mxu0
      %v744 = vadd.f32 %v682, %v743
      %745 = vmatmul.bf16.gmra.mxu0 %v661
      %v746 = vpop.f32.mrf.mxu0
      %v747 = vadd.f32 %v682, %v746
      %v748 = vpop.f32.mrf.mxu0
      %v749 = vadd.f32 %v682, %v748
      %750 = vmatmul.bf16.gmra.mxu0 %v662
      %v751 = vpop.f32.mrf.mxu0
      %v752 = vadd.f32 %v682, %v751
      %v753 = vpop.f32.mrf.mxu0
      %v754 = vadd.f32 %v682, %v753
      %755 = vmatmul.bf16.gmra.mxu0 %v663
      %v756 = vpop.f32.mrf.mxu0
      %v757 = vadd.f32 %v682, %v756
      %v758 = vpop.f32.mrf.mxu0
      %759 = vdwg.mxu0
      %v760 = vmax.f32 %v742, 0.0
      %v761 = vmax.f32 %v744, 0.0
      %v762 = vmax.f32 %v747, 0.0
      %v763 = vmax.f32 %v749, 0.0
      %v764 = vmax.f32 %v752, 0.0
      %v765 = vmax.f32 %v754, 0.0
      %v766 = vmax.f32 %v757, 0.0
      %v767 = vpack.c.bf16 %v761, %v760
      %v768 = vpack.c.bf16 %v763, %v762
      %v769 = vpack.c.bf16 %v765, %v764
      %v770 = vpack.c.bf16 %v766, %v766
      %v771 = vld [vmem:[%s7] sm:$0xf]
      %v772 = vld [vmem:[%s7 + $0x4] sm:$0xf]
      %v773 = vld [vmem:[%s7 + $0x8] sm:$0xf]
      %v774 = vld [vmem:[%s7 + $0xc] sm:$0xf]
      %v775 = vld [vmem:[%s7 + $0x10] sm:$0xf]
      %v776 = vld [vmem:[%s7 + $0x14] sm:$0xf]
      %v777 = vld [vmem:[%s7 + $0x18] sm:$0xf]
      %v778 = vld [vmem:[%s7 + $0x1c] sm:$0xf]
      %v779 = vld [vmem:[%s8] sm:$0x1]
      %v781 = vperm.slane %v779, 0
      %v791 = vunpack.c.l.b16 %v771
      %v792 = vunpack.c.l.b16 %v772
      %v793 = vunpack.c.l.b16 %v773
      %v794 = vunpack.c.l.b16 %v774
      %v795 = vunpack.c.l.b16 %v775
      %v796 = vunpack.c.l.b16 %v776
      %v797 = vunpack.c.l.b16 %v777
      %v798 = vunpack.c.l.b16 %v778
      %v799 = vpack.c.b16 %v792, %v791
      %v800 = vpack.c.b16 %v794, %v793
      %v801 = vpack.c.b16 %v796, %v795
      %v802 = vpack.c.b16 %v798, %v797
      %vm807 = vcmask 523264
      %v809 = vsel %vm807, %v767, 0
      %v812 = vsel %vm807, %v768, 0
      %v815 = vsel %vm807, %v769, 0
      %v818 = vsel %vm807, %v770, 0
      %820 = vmatpush.bf16.msra.mxu0 0
      %821 = vmatpush.bf16.msra.mxu0 0
      %822 = vmatpush.bf16.msra.mxu0 0
      %823 = vmatpush.bf16.msra.mxu0 0
      %824 = vmatpush.bf16.msra.mxu0 %v802
      %825 = vmatpush.bf16.msra.mxu0 %v801
      %826 = vmatpush.bf16.msra.mxu0 %v800
      %827 = vmatpush.bf16.msra.mxu0 %v799
      %828 = vmatmul.bf16.gmra.mxu0 %v809
      %v829 = vpop.f32.mrf.mxu0
      %v830 = vadd.f32 %v781, %v829
      %v831 = vpop.f32.mrf.mxu0
      %v832 = vadd.f32 %v781, %v831
      %833 = vmatmul.bf16.gmra.mxu0 %v812
      %v834 = vpop.f32.mrf.mxu0
      %v835 = vadd.f32 %v781, %v834
      %v836 = vpop.f32.mrf.mxu0
      %v837 = vadd.f32 %v781, %v836
      %838 = vmatmul.bf16.gmra.mxu0 %v815
      %v839 = vpop.f32.mrf.mxu0
      %v840 = vadd.f32 %v781, %v839
      %v841 = vpop.f32.mrf.mxu0
      %v842 = vadd.f32 %v781, %v841
      %843 = vmatmul.bf16.gmra.mxu0 %v818
      %v844 = vpop.f32.mrf.mxu0
      %v845 = vadd.f32 %v781, %v844
      %v846 = vpop.f32.mrf.mxu0
      %847 = vdwg.mxu0
      %vm848 = vcmask 64512
      %849 = vst.msk [vmem:[%s334] sm:$0xff] %vm848, %v830
      %850 = vst.msk [vmem:[%s334 + $0x8] sm:$0xff] %vm848, %v832
      %851 = vst.msk [vmem:[%s334 + $0x10] sm:$0xff] %vm848, %v835
      %852 = vst.msk [vmem:[%s334 + $0x18] sm:$0xff] %vm848, %v837
      %853 = vst.msk [vmem:[%s334 + $0x20] sm:$0xff] %vm848, %v840
      %854 = vst.msk [vmem:[%s334 + $0x28] sm:$0xff] %vm848, %v842
      %855 = vst.msk [vmem:[%s334 + $0x30] sm:$0xff] %vm848, %v845
      %s856 = smul.u32 7, %s20
      %p857 = scmp.lt.s32.totalorder %s856, 13
      %s858 = scalar_select %p857, %s856, 13
      %s859 = smul.addr %s858, 8
      %s860 = scalar_lea.vmem %s9, %s859
      // Predicated region
      $region57: #{tpu_custom_call.1} parent=55 // pred_check
        %p861 = pneg %p232
      $region58: #{tpu_custom_call.1} parent=55 // pred_check_branch
        %863 = sbr.rel (%p861) target = $region60
      $region59: #{tpu_custom_call.1} parent=55 // pred_region
        %s864 = smul.u32 7, %s20
      $region60: #{tpu_custom_call.1} parent=55 // pred_fallthru
        _
    $region56: #{tpu_custom_call.1} parent=5 // pred_fallthru
      _
    %p865 = scmp.le.s32.totalorder 2, %s15
    // Predicated region
    $region61: #{tpu_custom_call.1} parent=5 // pred_check
      %p866 = pneg %p865
    $region62: #{tpu_custom_call.1} parent=5 // pred_check_branch
      %868 = sbr.rel (%p866) target = $region64
    $region63: #{tpu_custom_call.1} parent=5 // pred_region
      %s869 = ssub.s32 %s15, 2
      // Predicated region
      $region65: #{tpu_custom_call.1} parent=63 // pred_check
        %p870 = pneg %p238
      $region66: #{tpu_custom_call.1} parent=63 // pred_check_branch
        %872 = sbr.rel (%p870) target = $region68
      $region67: #{tpu_custom_call.1} parent=63 // pred_region
        %s873 = smul.u32 7, %s21
        %p874 = scmp.lt.s32.totalorder %s873, 13
        %s875 = scalar_select %p874, %s873, 13
        %s876 = smul.addr %s875, 8
        %s877 = scalar_lea.vmem %s9, %s876
      $region68: #{tpu_custom_call.1} parent=63 // pred_fallthru
        _
    $region64: #{tpu_custom_call.1} parent=5 // pred_fallthru
      _
  $region6: #{tpu_custom_call.1} parent=0 // loop_footer
    %s19 = sadd.s32 1, %s15
  $region7: #{tpu_custom_call.1} parent=0 // loop_footer_branch
    %14 = sbr.rel target = $region3
  $region8: #{tpu_custom_call.1} parent=0 // loop_exit
    _

</llo_original>
